<compile_context>
chip_gen: v7x
topology: tpu7x:2x2x1
jax: 0.10.0
libtpu: 0.0.40
codegen_flags: <defaults>
</compile_context>

<pallas_src>
import jax
import jax.numpy as jnp
from jax.experimental import pallas as pl
from jax.experimental.pallas import tpu as pltpu

LAYER_DIMS = [(9, 128), (128, 128), (128, 64), (64, 9)]
OUT_PAD = 16          # final layer padded only to 16 lanes (full last dim -> legal block)
MIN_SPLIT = 1024      # split batch across >=2 grid steps once there is this much work


def dqn_kernel(x_ref, w1_ref, b1_ref, w2_ref, b2_ref, w3_ref, b3_ref,
               w4_ref, b4_ref, o_ref):
    x = x_ref[...].astype(jnp.bfloat16)              # (TILE, 9)

    # fc1 + relu: single MXU pass (K=9 costs the same vmatmul count as K<=256),
    # bf16 x bf16 with f32 accumulation; bias-add / ReLU stay f32.
    h = jnp.dot(x, w1_ref[...], preferred_element_type=jnp.float32) + b1_ref[...]
    h = jnp.maximum(h, 0.0)                          # (TILE, 128) f32

    # dropout(p=0.5): identity in eval mode.

    # fc2 + relu (MXU: bf16 inputs, f32 accumulate, f32 epilogue)
    h = jnp.dot(h.astype(jnp.bfloat16), w2_ref[...],
                preferred_element_type=jnp.float32) + b2_ref[...]
    h = jnp.maximum(h, 0.0)

    # fc3 + relu
    h = jnp.dot(h.astype(jnp.bfloat16), w3_ref[...],
                preferred_element_type=jnp.float32) + b3_ref[...]
    h = jnp.maximum(h, 0.0)

    # fc4 (no activation); w4/b4 zero-padded to 16 lanes -> only 64 B/row written to HBM.
    out = jnp.dot(h.astype(jnp.bfloat16), w4_ref[...],
                  preferred_element_type=jnp.float32) + b4_ref[...]
    o_ref[...] = out.astype(o_ref.dtype)


def _round_up(x, m):
    return ((x + m - 1) // m) * m


def dqn_forward(x, params, *, max_tile=4096, vmem_limit_bytes=48 * 1024 * 1024):
    """x: (N, 9) float32. Returns (N, 9) float32."""
    n, f = x.shape
    assert f == 9, "DQN expects 9 input features"

    # Balanced batch tiling: enough tiles to cover n with max_tile, at least 2 tiles
    # for large batches (keeps both v7x TensorCores busy), tiles sublane-aligned.
    grid_n = max(pl.cdiv(n, max_tile), 1)
    if grid_n == 1 and n >= 2 * MIN_SPLIT:
        grid_n = 2
    tile = _round_up(max(pl.cdiv(n, grid_n), 1), 8)
    padded_n = grid_n * tile
    if padded_n != n:
        x = jnp.pad(x, ((0, padded_n - n), (0, 0)))

    const = lambda i: (0, 0)                         # weights: resident, DMA'd once

    param_list = (params["w1"], params["b1"], params["w2"], params["b2"],
                  params["w3"], params["b3"], params["w4"], params["b4"])
    flops = 2 * padded_n * (9 * 128 + 128 * 128 + 128 * 64 + 64 * OUT_PAD)
    weight_bytes = sum(int(p.size) * p.dtype.itemsize for p in param_list)
    bytes_accessed = padded_n * 9 * 4 + padded_n * OUT_PAD * 4 + weight_bytes

    out = pl.pallas_call(
        dqn_kernel,
        out_shape=jax.ShapeDtypeStruct((padded_n, OUT_PAD), jnp.float32),
        grid=(grid_n,),
        in_specs=[
            pl.BlockSpec((tile, 9), lambda i: (i, 0)),       # x: streamed per tile
            pl.BlockSpec((9, 128), const),                   # w1 (bf16)
            pl.BlockSpec((1, 128), const),                   # b1 (f32)
            pl.BlockSpec((128, 128), const),                 # w2 (bf16)
            pl.BlockSpec((1, 128), const),                   # b2
            pl.BlockSpec((128, 64), const),                  # w3 (bf16)
            pl.BlockSpec((1, 64), const),                    # b3
            pl.BlockSpec((64, OUT_PAD), const),              # w4 (bf16, padded to 16)
            pl.BlockSpec((1, OUT_PAD), const),               # b4 (padded to 16)
        ],
        out_specs=pl.BlockSpec((tile, OUT_PAD), lambda i: (i, 0)),
        compiler_params=pltpu.CompilerParams(
            dimension_semantics=("parallel",),               # megacore split on v7x
            vmem_limit_bytes=vmem_limit_bytes),
        cost_estimate=pl.CostEstimate(flops=flops, transcendentals=0,
                                      bytes_accessed=bytes_accessed),
    )(x, *param_list)

    return out[:n, :9]


def init_params(key):
    """PyTorch nn.Linear-style init (U[-1/sqrt(fan_in), 1/sqrt(fan_in)]).

    Weights are pre-transposed to (in_features, out_features) and stored bf16
    (MXU path); biases are f32 (1, out). The final layer is zero-padded to
    OUT_PAD (=16) lanes so the padded output columns are exactly zero.
    """
    params = {}
    for i, (fan_in, fan_out) in enumerate(LAYER_DIMS, start=1):
        key, kw, kb = jax.random.split(key, 3)
        bound = float(fan_in) ** -0.5
        w = jax.random.uniform(kw, (fan_in, fan_out), jnp.float32, -bound, bound)
        b = jax.random.uniform(kb, (1, fan_out), jnp.float32, -bound, bound)
        if i == len(LAYER_DIMS):  # pad final layer to OUT_PAD lanes
            w = jnp.pad(w, ((0, 0), (0, OUT_PAD - fan_out)))
            b = jnp.pad(b, ((0, 0), (0, OUT_PAD - fan_out)))
        params[f"w{i}"] = w.astype(jnp.bfloat16)
        params[f"b{i}"] = b
    return params


def dqn_reference(x, params):
    """Pure-JAX reference of the same forward (eval-mode dropout), same precisions."""
    h = jnp.maximum(
        jnp.dot(x.astype(jnp.bfloat16), params["w1"],
                preferred_element_type=jnp.float32) + params["b1"], 0.0)
    h = jnp.maximum(
        jnp.dot(h.astype(jnp.bfloat16), params["w2"],
                preferred_element_type=jnp.float32) + params["b2"], 0.0)
    h = jnp.maximum(
        jnp.dot(h.astype(jnp.bfloat16), params["w3"],
                preferred_element_type=jnp.float32) + params["b3"], 0.0)
    out = jnp.dot(h.astype(jnp.bfloat16), params["w4"],
                  preferred_element_type=jnp.float32) + params["b4"]
    return out[:, :9]


if __name__ == "__main__":
    key = jax.random.PRNGKey(0)
    key, kx = jax.random.split(key)
    batch = 8
    x = jax.random.normal(kx, (batch, 9), jnp.float32)

    params = init_params(key)

    out = jax.block_until_ready(dqn_forward(x, params))
    ref = dqn_reference(x, params)

    assert out.shape == (batch, 9)
    assert jnp.allclose(out, ref, atol=1e-2, rtol=1e-2), "mismatch vs reference"

    print("KERNEL_OK")
</pallas_src>

<mosaic_0001>
module attributes {stable_mosaic.version = 11 : i64} {
  func.func @dqn_kernel(%arg0: i32, %arg1: memref<8x9xf32, #tpu.memory_space<vmem>>, %arg2: memref<9x128xbf16, #tpu.memory_space<vmem>>, %arg3: memref<1x128xf32, #tpu.memory_space<vmem>>, %arg4: memref<128x128xbf16, #tpu.memory_space<vmem>>, %arg5: memref<1x128xf32, #tpu.memory_space<vmem>>, %arg6: memref<128x64xbf16, #tpu.memory_space<vmem>>, %arg7: memref<1x64xf32, #tpu.memory_space<vmem>>, %arg8: memref<64x16xbf16, #tpu.memory_space<vmem>>, %arg9: memref<1x16xf32, #tpu.memory_space<vmem>>, %arg10: memref<8x16xf32, #tpu.memory_space<vmem>>) attributes {dimension_semantics = [#tpu.dimension_semantics<parallel>], iteration_bounds = array<i64: 1>, scalar_prefetch = 0 : i64, scratch_operands = 0 : i64, tpu.core_type = #tpu.core_type<tc>, window_params = [{transform_indices = @transform_0, window_bounds = array<i64: 8, 9>}, {pipeline_mode = #tpu.pipeline_mode<synchronous>, transform_indices = @transform_1, window_bounds = array<i64: 9, 128>}, {pipeline_mode = #tpu.pipeline_mode<synchronous>, transform_indices = @transform_2, window_bounds = array<i64: 1, 128>}, {pipeline_mode = #tpu.pipeline_mode<synchronous>, transform_indices = @transform_3, window_bounds = array<i64: 128, 128>}, {pipeline_mode = #tpu.pipeline_mode<synchronous>, transform_indices = @transform_4, window_bounds = array<i64: 1, 128>}, {pipeline_mode = #tpu.pipeline_mode<synchronous>, transform_indices = @transform_5, window_bounds = array<i64: 128, 64>}, {pipeline_mode = #tpu.pipeline_mode<synchronous>, transform_indices = @transform_6, window_bounds = array<i64: 1, 64>}, {pipeline_mode = #tpu.pipeline_mode<synchronous>, transform_indices = @transform_7, window_bounds = array<i64: 64, 16>}, {pipeline_mode = #tpu.pipeline_mode<synchronous>, transform_indices = @transform_8, window_bounds = array<i64: 1, 16>}, {transform_indices = @transform_9, window_bounds = array<i64: 8, 16>}]} {
    %c0 = arith.constant 0 : index
    %c0_0 = arith.constant 0 : index
    %0 = vector.load %arg1[%c0, %c0_0] : memref<8x9xf32, #tpu.memory_space<vmem>>, vector<8x9xf32>
    %1 = arith.truncf %0 : vector<8x9xf32> to vector<8x9xbf16>
    %c0_1 = arith.constant 0 : index
    %c0_2 = arith.constant 0 : index
    %2 = vector.load %arg2[%c0_1, %c0_2] : memref<9x128xbf16, #tpu.memory_space<vmem>>, vector<9x128xbf16>
    %cst = arith.constant dense<0.000000e+00> : vector<8x128xf32>
    %3 = tpu.matmul %1, %2, %cst {dimension_numbers = #tpu.dot_dimension_numbers<[1], [0], [0], [1], [0, 0, 1, 1], [], []>} : vector<8x9xbf16>, vector<9x128xbf16>, vector<8x128xf32> -> vector<8x128xf32>
    %c0_3 = arith.constant 0 : index
    %c0_4 = arith.constant 0 : index
    %4 = vector.load %arg3[%c0_3, %c0_4] : memref<1x128xf32, #tpu.memory_space<vmem>>, vector<1x128xf32>
    %5 = vector.broadcast %4 : vector<1x128xf32> to vector<8x128xf32>
    %6 = arith.addf %3, %5 : vector<8x128xf32>
    %cst_5 = arith.constant 0.000000e+00 : f32
    %7 = vector.broadcast %cst_5 : f32 to vector<8x128xf32>
    %8 = arith.maximumf %6, %7 : vector<8x128xf32>
    %9 = arith.truncf %8 : vector<8x128xf32> to vector<8x128xbf16>
    %c0_6 = arith.constant 0 : index
    %c0_7 = arith.constant 0 : index
    %10 = vector.load %arg4[%c0_6, %c0_7] : memref<128x128xbf16, #tpu.memory_space<vmem>>, vector<128x128xbf16>
    %cst_8 = arith.constant dense<0.000000e+00> : vector<8x128xf32>
    %11 = tpu.matmul %9, %10, %cst_8 {dimension_numbers = #tpu.dot_dimension_numbers<[1], [0], [0], [1], [0, 0, 1, 1], [], []>} : vector<8x128xbf16>, vector<128x128xbf16>, vector<8x128xf32> -> vector<8x128xf32>
    %c0_9 = arith.constant 0 : index
    %c0_10 = arith.constant 0 : index
    %12 = vector.load %arg5[%c0_9, %c0_10] : memref<1x128xf32, #tpu.memory_space<vmem>>, vector<1x128xf32>
    %13 = vector.broadcast %12 : vector<1x128xf32> to vector<8x128xf32>
    %14 = arith.addf %11, %13 : vector<8x128xf32>
    %cst_11 = arith.constant 0.000000e+00 : f32
    %15 = vector.broadcast %cst_11 : f32 to vector<8x128xf32>
    %16 = arith.maximumf %14, %15 : vector<8x128xf32>
    %17 = arith.truncf %16 : vector<8x128xf32> to vector<8x128xbf16>
    %c0_12 = arith.constant 0 : index
    %c0_13 = arith.constant 0 : index
    %18 = vector.load %arg6[%c0_12, %c0_13] : memref<128x64xbf16, #tpu.memory_space<vmem>>, vector<128x64xbf16>
    %cst_14 = arith.constant dense<0.000000e+00> : vector<8x64xf32>
    %19 = tpu.matmul %17, %18, %cst_14 {dimension_numbers = #tpu.dot_dimension_numbers<[1], [0], [0], [1], [0, 0, 1, 1], [], []>} : vector<8x128xbf16>, vector<128x64xbf16>, vector<8x64xf32> -> vector<8x64xf32>
    %c0_15 = arith.constant 0 : index
    %c0_16 = arith.constant 0 : index
    %20 = vector.load %arg7[%c0_15, %c0_16] : memref<1x64xf32, #tpu.memory_space<vmem>>, vector<1x64xf32>
    %21 = vector.broadcast %20 : vector<1x64xf32> to vector<8x64xf32>
    %22 = arith.addf %19, %21 : vector<8x64xf32>
    %cst_17 = arith.constant 0.000000e+00 : f32
    %23 = vector.broadcast %cst_17 : f32 to vector<8x64xf32>
    %24 = arith.maximumf %22, %23 : vector<8x64xf32>
    %25 = arith.truncf %24 : vector<8x64xf32> to vector<8x64xbf16>
    %c0_18 = arith.constant 0 : index
    %c0_19 = arith.constant 0 : index
    %26 = vector.load %arg8[%c0_18, %c0_19] : memref<64x16xbf16, #tpu.memory_space<vmem>>, vector<64x16xbf16>
    %cst_20 = arith.constant dense<0.000000e+00> : vector<8x16xf32>
    %27 = tpu.matmul %25, %26, %cst_20 {dimension_numbers = #tpu.dot_dimension_numbers<[1], [0], [0], [1], [0, 0, 1, 1], [], []>} : vector<8x64xbf16>, vector<64x16xbf16>, vector<8x16xf32> -> vector<8x16xf32>
    %c0_21 = arith.constant 0 : index
    %c0_22 = arith.constant 0 : index
    %28 = vector.load %arg9[%c0_21, %c0_22] : memref<1x16xf32, #tpu.memory_space<vmem>>, vector<1x16xf32>
    %29 = vector.broadcast %28 : vector<1x16xf32> to vector<8x16xf32>
    %30 = arith.addf %27, %29 : vector<8x16xf32>
    %c0_23 = arith.constant 0 : index
    %c0_24 = arith.constant 0 : index
    %31 = vector.load %arg10[%c0_23, %c0_24] : memref<8x16xf32, #tpu.memory_space<vmem>>, vector<8x16xf32>
    tpu.vector_store %arg10[%c0_23, %c0_24], %30 {strides = array<i32>} : memref<8x16xf32, #tpu.memory_space<vmem>>, vector<8x16xf32>,
    return
  }
  func.func @transform_0(%arg0: i32) -> (i32, i32) {
    %c0_i32 = arith.constant 0 : i32
    %c0_i32_0 = arith.constant 0 : i32
    return %arg0, %c0_i32 : i32, i32
  }
  func.func @transform_1(%arg0: i32) -> (i32, i32) {
    %c0_i32 = arith.constant 0 : i32
    %c0_i32_0 = arith.constant 0 : i32
    %c0_i32_1 = arith.constant 0 : i32
    return %c0_i32, %c0_i32_0 : i32, i32
  }
  func.func @transform_2(%arg0: i32) -> (i32, i32) {
    %c0_i32 = arith.constant 0 : i32
    %c0_i32_0 = arith.constant 0 : i32
    %c0_i32_1 = arith.constant 0 : i32
    return %c0_i32, %c0_i32_0 : i32, i32
  }
  func.func @transform_3(%arg0: i32) -> (i32, i32) {
    %c0_i32 = arith.constant 0 : i32
    %c0_i32_0 = arith.constant 0 : i32
    %c0_i32_1 = arith.constant 0 : i32
    return %c0_i32, %c0_i32_0 : i32, i32
  }
  func.func @transform_4(%arg0: i32) -> (i32, i32) {
    %c0_i32 = arith.constant 0 : i32
    %c0_i32_0 = arith.constant 0 : i32
    %c0_i32_1 = arith.constant 0 : i32
    return %c0_i32, %c0_i32_0 : i32, i32
  }
  func.func @transform_5(%arg0: i32) -> (i32, i32) {
    %c0_i32 = arith.constant 0 : i32
    %c0_i32_0 = arith.constant 0 : i32
    %c0_i32_1 = arith.constant 0 : i32
    return %c0_i32, %c0_i32_0 : i32, i32
  }
  func.func @transform_6(%arg0: i32) -> (i32, i32) {
    %c0_i32 = arith.constant 0 : i32
    %c0_i32_0 = arith.constant 0 : i32
    %c0_i32_1 = arith.constant 0 : i32
    return %c0_i32, %c0_i32_0 : i32, i32
  }
  func.func @transform_7(%arg0: i32) -> (i32, i32) {
    %c0_i32 = arith.constant 0 : i32
    %c0_i32_0 = arith.constant 0 : i32
    %c0_i32_1 = arith.constant 0 : i32
    return %c0_i32, %c0_i32_0 : i32, i32
  }
  func.func @transform_8(%arg0: i32) -> (i32, i32) {
    %c0_i32 = arith.constant 0 : i32
    %c0_i32_0 = arith.constant 0 : i32
    %c0_i32_1 = arith.constant 0 : i32
    return %c0_i32, %c0_i32_0 : i32, i32
  }
  func.func @transform_9(%arg0: i32) -> (i32, i32) {
    %c0_i32 = arith.constant 0 : i32
    %c0_i32_0 = arith.constant 0 : i32
    return %arg0, %c0_i32 : i32, i32
  }
}

</mosaic_0001>

<llo_original>
// kernel: tpu_custom_call.1
$region0: #{tpu_custom_call.1}
  #allocation0 [shape = 'u32[]', space=smem, size = 0x4, offset = 0x4, fixed_abs, tag = 'smem constant byte address 0x4 - core index']
  #allocation1 [shape = 'u32[144,128]{1,0:T(1,128)}', space=vmem, size = 0x12000, scoped, tag = 'internal scratch']
  %s0 = inlined_call_operand.vmem [shape: f32[8,9], index: 0, kind: input, shape index: {}]
  %s1 = inlined_call_operand.vmem [shape: bf16[9,128], index: 1, kind: input, shape index: {}]
  %s2 = inlined_call_operand.vmem [shape: f32[1,128], index: 2, kind: input, shape index: {}]
  %s3 = inlined_call_operand.vmem [shape: bf16[128,128], index: 3, kind: input, shape index: {}]
  %s4 = inlined_call_operand.vmem [shape: f32[1,128], index: 4, kind: input, shape index: {}]
  %s5 = inlined_call_operand.vmem [shape: bf16[128,64], index: 5, kind: input, shape index: {}]
  %s6 = inlined_call_operand.vmem [shape: f32[1,64], index: 6, kind: input, shape index: {}]
  %s7 = inlined_call_operand.vmem [shape: bf16[64,16], index: 7, kind: input, shape index: {}]
  %s8 = inlined_call_operand.vmem [shape: f32[1,16], index: 8, kind: input, shape index: {}]
  %s9 = inlined_call_operand.hbm [shape: f32[8,16], index: 9, kind: output, shape index: {}]
  %s10 = sld [smem:[#allocation0]]
  $region46: #{tpu_custom_call.1} parent=0
    _
  %s12 = ssub.s32 1, %s10
  %s13 = scalar_select 0, %s12, %s10
  $region1: #{tpu_custom_call.1} parent=0
    #allocation2 [shape = 'u8[4096]{0}', space=vmem, size = 0x1000, scoped, tag = 'output window, operand 0, single buffered']
    #allocation3 [shape = 's32[1]{0}', space=sflag, size = 0x4, scoped, tag = 'scoped memory for tpu_custom_call.1']
    %14 = vsyncpa [#allocation3], 0
    // Predicated region
    $region2: #{tpu_custom_call.1} parent=1 // pred_check
      _
    $region3: #{tpu_custom_call.1} parent=1 // pred_check_branch
      %16 = sbr.rel (0) target = $region5
    $region4: #{tpu_custom_call.1} parent=1 // pred_region
      _
    $region5: #{tpu_custom_call.1} parent=1 // pred_fallthru
      _
    // Predicated region
    $region6: #{tpu_custom_call.1} parent=1 // pred_check
      _
    $region7: #{tpu_custom_call.1} parent=1 // pred_check_branch
      %18 = sbr.rel (0) target = $region9
    $region8: #{tpu_custom_call.1} parent=1 // pred_region
      _
    $region9: #{tpu_custom_call.1} parent=1 // pred_fallthru
      _
    // Predicated region
    $region10: #{tpu_custom_call.1} parent=1 // pred_check
      _
    $region11: #{tpu_custom_call.1} parent=1 // pred_check_branch
      %20 = sbr.rel (0) target = $region13
    $region12: #{tpu_custom_call.1} parent=1 // pred_region
      _
    $region13: #{tpu_custom_call.1} parent=1 // pred_fallthru
      _
    // Predicated region
    $region14: #{tpu_custom_call.1} parent=1 // pred_check
      _
    $region15: #{tpu_custom_call.1} parent=1 // pred_check_branch
      %22 = sbr.rel (0) target = $region17
    $region16: #{tpu_custom_call.1} parent=1 // pred_region
      _
    $region17: #{tpu_custom_call.1} parent=1 // pred_fallthru
      _
    // Predicated region
    $region18: #{tpu_custom_call.1} parent=1 // pred_check
      _
    $region19: #{tpu_custom_call.1} parent=1 // pred_check_branch
      %24 = sbr.rel (0) target = $region21
    $region20: #{tpu_custom_call.1} parent=1 // pred_region
      _
    $region21: #{tpu_custom_call.1} parent=1 // pred_fallthru
      _
    // Predicated region
    $region22: #{tpu_custom_call.1} parent=1 // pred_check
      _
    $region23: #{tpu_custom_call.1} parent=1 // pred_check_branch
      %26 = sbr.rel (0) target = $region25
    $region24: #{tpu_custom_call.1} parent=1 // pred_region
      _
    $region25: #{tpu_custom_call.1} parent=1 // pred_fallthru
      _
    // Predicated region
    $region26: #{tpu_custom_call.1} parent=1 // pred_check
      _
    $region27: #{tpu_custom_call.1} parent=1 // pred_check_branch
      %28 = sbr.rel (0) target = $region29
    $region28: #{tpu_custom_call.1} parent=1 // pred_region
      _
    $region29: #{tpu_custom_call.1} parent=1 // pred_fallthru
      _
    // Predicated region
    $region30: #{tpu_custom_call.1} parent=1 // pred_check
      _
    $region31: #{tpu_custom_call.1} parent=1 // pred_check_branch
      %30 = sbr.rel (0) target = $region33
    $region32: #{tpu_custom_call.1} parent=1 // pred_region
      _
    $region33: #{tpu_custom_call.1} parent=1 // pred_fallthru
      _
    // Predicated region
    $region34: #{tpu_custom_call.1} parent=1 // pred_check
      _
    $region35: #{tpu_custom_call.1} parent=1 // pred_check_branch
      %32 = sbr.rel (0) target = $region37
    $region36: #{tpu_custom_call.1} parent=1 // pred_region
      _
    $region37: #{tpu_custom_call.1} parent=1 // pred_fallthru
      _
    %v34 = vld [vmem:[%s0] sm:$0xff]
    %v35 = vpack.c.bf16 %v34, %v34
    %v36 = vld [vmem:[%s1] sm:$0xf]
    %v37 = vld [vmem:[%s1 + $0x4] sm:$0x1]
    %v38 = vld [vmem:[%s2] sm:$0x1]
    %v40 = vlaneseq
    %v41 = vshrl.u32 %v40, 7
    %v42 = vsub.s32 0, %v41
    %v43 = vrot.slane %v38, %v42
    %v47 = vunpack.c.l.b16 %v36
    %v48 = vunpack.c.l.b16 %v37
    %v49 = vpack.c.b16 %v48, %v47
    %vm50 = vcmask 72704
    %v52 = vsel %vm50, %v35, 0
    %vm54 = vcmask 1043456
    %vm55 = vcmask 1044480
    %v56 = vsel %vm54, 4294967295, 65535
    %v57 = vsel %vm55, %v56, 0
    %v59 = vand.u32 %v49, %v57
    %61 = vmatprep.subr.bf16.mxu0 0
    %62 = vmatpush1.bf16.msra.mxu0 %v59
    %63 = vmatprep.subr.bf16.mxu0 0
    %64 = vmatpush1.bf16.msra.mxu0 0
    %65 = vmatprep.subr.bf16.mxu0 0
    %66 = vmatpush1.bf16.msra.mxu0 0
    %67 = vmatprep.subr.bf16.mxu0 0
    %68 = vmatpush1.bf16.msra.mxu0 0
    %69 = vmatprep.subr.bf16.mxu0 0
    %70 = vmatpush1.bf16.msra.mxu0 0
    %71 = vmatprep.subr.bf16.mxu0 0
    %72 = vmatpush1.bf16.msra.mxu0 0
    %73 = vmatprep.subr.bf16.mxu0 0
    %74 = vmatpush1.bf16.msra.mxu0 0
    %75 = vmatprep.subr.bf16.mxu0 0
    %76 = vmatpush1.bf16.msra.mxu0 0
    %77 = vmatprep.subr.bf16.mxu0 0
    %78 = vmatpush1.bf16.msra.mxu0 0
    %79 = vmatprep.subr.bf16.mxu0 0
    %80 = vmatpush1.bf16.msra.mxu0 0
    %81 = vmatprep.subr.bf16.mxu0 0
    %82 = vmatpush1.bf16.msra.mxu0 0
    %83 = vmatprep.subr.bf16.mxu0 0
    %84 = vmatpush1.bf16.msra.mxu0 0
    %85 = vmatprep.subr.bf16.mxu0 0
    %86 = vmatpush1.bf16.msra.mxu0 0
    %87 = vmatprep.subr.bf16.mxu0 0
    %88 = vmatpush1.bf16.msra.mxu0 0
    %89 = vmatprep.subr.bf16.mxu0 0
    %90 = vmatpush1.bf16.msra.mxu0 0
    %91 = vmatprep.subr.bf16.mxu0 0
    %92 = vmatpush1.bf16.msra.mxu0 0
    %93 = vmatprep.mubr.bf16.mxu0 0
    %94 = vmatmul.mubr.bf16.gmra.mrb[0].mxu0 %v52
    %v95 = vpop.f32.mrb[0].mxu0
    %v96 = vadd.f32 %v43, %v95
    %v97 = vpop.f32.mrb[0].mxu0
    %v98 = vpop.f32.mrb[0].mxu0
    %v99 = vpop.f32.mrb[0].mxu0
    %100 = vdwg.mxu0
    %v101 = vmax.f32 %v96, 0.0
    %v102 = vpack.c.bf16 %v101, %v101
    %v103 = vld [vmem:[%s3] sm:$0xf]
    %v104 = vld [vmem:[%s3 + $0x4] sm:$0xf]
    %v105 = vld [vmem:[%s3 + $0x8] sm:$0xf]
    %v106 = vld [vmem:[%s3 + $0xc] sm:$0xf]
    %v107 = vld [vmem:[%s3 + $0x10] sm:$0xf]
    %v108 = vld [vmem:[%s3 + $0x14] sm:$0xf]
    %v109 = vld [vmem:[%s3 + $0x18] sm:$0xf]
    %v110 = vld [vmem:[%s3 + $0x1c] sm:$0xf]
    %v111 = vld [vmem:[%s3 + $0x20] sm:$0xf]
    %v112 = vld [vmem:[%s3 + $0x24] sm:$0xf]
    %v113 = vld [vmem:[%s3 + $0x28] sm:$0xf]
    %v114 = vld [vmem:[%s3 + $0x2c] sm:$0xf]
    %v115 = vld [vmem:[%s3 + $0x30] sm:$0xf]
    %v116 = vld [vmem:[%s3 + $0x34] sm:$0xf]
    %v117 = vld [vmem:[%s3 + $0x38] sm:$0xf]
    %v118 = vld [vmem:[%s3 + $0x3c] sm:$0xf]
    %v119 = vld [vmem:[%s4] sm:$0x1]
    %v121 = vlaneseq
    %v122 = vshrl.u32 %v121, 7
    %v123 = vsub.s32 0, %v122
    %v124 = vrot.slane %v119, %v123
    %v142 = vunpack.c.l.b16 %v103
    %v143 = vunpack.c.l.b16 %v104
    %v144 = vunpack.c.l.b16 %v105
    %v145 = vunpack.c.l.b16 %v106
    %v146 = vunpack.c.l.b16 %v107
    %v147 = vunpack.c.l.b16 %v108
    %v148 = vunpack.c.l.b16 %v109
    %v149 = vunpack.c.l.b16 %v110
    %v150 = vunpack.c.l.b16 %v111
    %v151 = vunpack.c.l.b16 %v112
    %v152 = vunpack.c.l.b16 %v113
    %v153 = vunpack.c.l.b16 %v114
    %v154 = vunpack.c.l.b16 %v115
    %v155 = vunpack.c.l.b16 %v116
    %v156 = vunpack.c.l.b16 %v117
    %v157 = vunpack.c.l.b16 %v118
    %v158 = vpack.c.b16 %v143, %v142
    %v159 = vpack.c.b16 %v145, %v144
    %v160 = vpack.c.b16 %v147, %v146
    %v161 = vpack.c.b16 %v149, %v148
    %v162 = vpack.c.b16 %v151, %v150
    %v163 = vpack.c.b16 %v153, %v152
    %v164 = vpack.c.b16 %v155, %v154
    %v165 = vpack.c.b16 %v157, %v156
    %174 = vmatprep.subr.bf16.mxu0 0
    %175 = vmatpush1.bf16.msra.mxu0 %v158
    %176 = vmatprep.subr.bf16.mxu0 0
    %177 = vmatpush1.bf16.msra.mxu0 %v159
    %178 = vmatprep.subr.bf16.mxu0 0
    %179 = vmatpush1.bf16.msra.mxu0 %v160
    %180 = vmatprep.subr.bf16.mxu0 0
    %181 = vmatpush1.bf16.msra.mxu0 %v161
    %182 = vmatprep.subr.bf16.mxu0 0
    %183 = vmatpush1.bf16.msra.mxu0 %v162
    %184 = vmatprep.subr.bf16.mxu0 0
    %185 = vmatpush1.bf16.msra.mxu0 %v163
    %186 = vmatprep.subr.bf16.mxu0 0
    %187 = vmatpush1.bf16.msra.mxu0 %v164
    %188 = vmatprep.subr.bf16.mxu0 0
    %189 = vmatpush1.bf16.msra.mxu0 %v165
    %190 = vmatprep.subr.bf16.mxu0 0
    %191 = vmatpush1.bf16.msra.mxu0 0
    %192 = vmatprep.subr.bf16.mxu0 0
    %193 = vmatpush1.bf16.msra.mxu0 0
    %194 = vmatprep.subr.bf16.mxu0 0
    %195 = vmatpush1.bf16.msra.mxu0 0
    %196 = vmatprep.subr.bf16.mxu0 0
    %197 = vmatpush1.bf16.msra.mxu0 0
    %198 = vmatprep.subr.bf16.mxu0 0
    %199 = vmatpush1.bf16.msra.mxu0 0
    %200 = vmatprep.subr.bf16.mxu0 0
    %201 = vmatpush1.bf16.msra.mxu0 0
    %202 = vmatprep.subr.bf16.mxu0 0
    %203 = vmatpush1.bf16.msra.mxu0 0
    %204 = vmatprep.subr.bf16.mxu0 0
    %205 = vmatpush1.bf16.msra.mxu0 0
    %206 = vmatprep.mubr.bf16.mxu0 0
    %207 = vmatmul.mubr.bf16.gmra.mrb[0].mxu0 %v102
    %v208 = vpop.f32.mrb[0].mxu0
    %v209 = vadd.f32 %v124, %v208
    %v210 = vpop.f32.mrb[0].mxu0
    %v211 = vpop.f32.mrb[0].mxu0
    %v212 = vpop.f32.mrb[0].mxu0
    %213 = vdwg.mxu0
    %v214 = vmax.f32 %v209, 0.0
    %v215 = vpack.c.bf16 %v214, %v214
    %v216 = vld [vmem:[%s5] sm:$0xf]
    %v217 = vld [vmem:[%s5 + $0x4] sm:$0xf]
    %v218 = vld [vmem:[%s5 + $0x8] sm:$0xf]
    %v219 = vld [vmem:[%s5 + $0xc] sm:$0xf]
    %v220 = vld [vmem:[%s5 + $0x10] sm:$0xf]
    %v221 = vld [vmem:[%s5 + $0x14] sm:$0xf]
    %v222 = vld [vmem:[%s5 + $0x18] sm:$0xf]
    %v223 = vld [vmem:[%s5 + $0x1c] sm:$0xf]
    %v224 = vld [vmem:[%s5 + $0x20] sm:$0xf]
    %v225 = vld [vmem:[%s5 + $0x24] sm:$0xf]
    %v226 = vld [vmem:[%s5 + $0x28] sm:$0xf]
    %v227 = vld [vmem:[%s5 + $0x2c] sm:$0xf]
    %v228 = vld [vmem:[%s5 + $0x30] sm:$0xf]
    %v229 = vld [vmem:[%s5 + $0x34] sm:$0xf]
    %v230 = vld [vmem:[%s5 + $0x38] sm:$0xf]
    %v231 = vld [vmem:[%s5 + $0x3c] sm:$0xf]
    %v232 = vld [vmem:[%s6] sm:$0x1]
    %v234 = vlaneseq
    %v235 = vshrl.u32 %v234, 7
    %v236 = vsub.s32 0, %v235
    %v237 = vrot.slane %v232, %v236
    %v255 = vunpack.c.l.b16 %v216
    %v256 = vunpack.c.l.b16 %v217
    %v257 = vunpack.c.l.b16 %v218
    %v258 = vunpack.c.l.b16 %v219
    %v259 = vunpack.c.l.b16 %v220
    %v260 = vunpack.c.l.b16 %v221
    %v261 = vunpack.c.l.b16 %v222
    %v262 = vunpack.c.l.b16 %v223
    %v263 = vunpack.c.l.b16 %v224
    %v264 = vunpack.c.l.b16 %v225
    %v265 = vunpack.c.l.b16 %v226
    %v266 = vunpack.c.l.b16 %v227
    %v267 = vunpack.c.l.b16 %v228
    %v268 = vunpack.c.l.b16 %v229
    %v269 = vunpack.c.l.b16 %v230
    %v270 = vunpack.c.l.b16 %v231
    %v271 = vpack.c.b16 %v256, %v255
    %v272 = vpack.c.b16 %v258, %v257
    %v273 = vpack.c.b16 %v260, %v259
    %v274 = vpack.c.b16 %v262, %v261
    %v275 = vpack.c.b16 %v264, %v263
    %v276 = vpack.c.b16 %v266, %v265
    %v277 = vpack.c.b16 %v268, %v267
    %v278 = vpack.c.b16 %v270, %v269
    %287 = vmatprep.subr.bf16.mxu0 0
    %288 = vmatpush1.bf16.msra.mxu0 %v271
    %289 = vmatprep.subr.bf16.mxu0 0
    %290 = vmatpush1.bf16.msra.mxu0 %v272
    %291 = vmatprep.subr.bf16.mxu0 0
    %292 = vmatpush1.bf16.msra.mxu0 %v273
    %293 = vmatprep.subr.bf16.mxu0 0
    %294 = vmatpush1.bf16.msra.mxu0 %v274
    %295 = vmatprep.subr.bf16.mxu0 0
    %296 = vmatpush1.bf16.msra.mxu0 %v275
    %297 = vmatprep.subr.bf16.mxu0 0
    %298 = vmatpush1.bf16.msra.mxu0 %v276
    %299 = vmatprep.subr.bf16.mxu0 0
    %300 = vmatpush1.bf16.msra.mxu0 %v277
    %301 = vmatprep.subr.bf16.mxu0 0
    %302 = vmatpush1.bf16.msra.mxu0 %v278
    %303 = vmatprep.subr.bf16.mxu0 0
    %304 = vmatpush1.bf16.msra.mxu0 0
    %305 = vmatprep.subr.bf16.mxu0 0
    %306 = vmatpush1.bf16.msra.mxu0 0
    %307 = vmatprep.subr.bf16.mxu0 0
    %308 = vmatpush1.bf16.msra.mxu0 0
    %309 = vmatprep.subr.bf16.mxu0 0
    %310 = vmatpush1.bf16.msra.mxu0 0
    %311 = vmatprep.subr.bf16.mxu0 0
    %312 = vmatpush1.bf16.msra.mxu0 0
    %313 = vmatprep.subr.bf16.mxu0 0
    %314 = vmatpush1.bf16.msra.mxu0 0
    %315 = vmatprep.subr.bf16.mxu0 0
    %316 = vmatpush1.bf16.msra.mxu0 0
    %317 = vmatprep.subr.bf16.mxu0 0
    %318 = vmatpush1.bf16.msra.mxu0 0
    %319 = vmatprep.mubr.bf16.mxu0 0
    %320 = vmatmul.mubr.bf16.gmra.mrb[0].mxu0 %v215
    %v321 = vpop.f32.mrb[0].mxu0
    %v322 = vadd.f32 %v237, %v321
    %v323 = vpop.f32.mrb[0].mxu0
    %v324 = vpop.f32.mrb[0].mxu0
    %v325 = vpop.f32.mrb[0].mxu0
    %326 = vdwg.mxu0
    %v327 = vmax.f32 %v322, 0.0
    %v328 = vpack.c.bf16 %v327, %v327
    %v329 = vld [vmem:[%s7] sm:$0xf]
    %v330 = vld [vmem:[%s7 + $0x4] sm:$0xf]
    %v331 = vld [vmem:[%s7 + $0x8] sm:$0xf]
    %v332 = vld [vmem:[%s7 + $0xc] sm:$0xf]
    %v333 = vld [vmem:[%s7 + $0x10] sm:$0xf]
    %v334 = vld [vmem:[%s7 + $0x14] sm:$0xf]
    %v335 = vld [vmem:[%s7 + $0x18] sm:$0xf]
    %v336 = vld [vmem:[%s7 + $0x1c] sm:$0xf]
    %v337 = vld [vmem:[%s8] sm:$0x1]
    %v339 = vlaneseq
    %v340 = vshrl.u32 %v339, 7
    %v341 = vsub.s32 0, %v340
    %v342 = vrot.slane %v337, %v341
    %v352 = vunpack.c.l.b16 %v329
    %v353 = vunpack.c.l.b16 %v330
    %v354 = vunpack.c.l.b16 %v331
    %v355 = vunpack.c.l.b16 %v332
    %v356 = vunpack.c.l.b16 %v333
    %v357 = vunpack.c.l.b16 %v334
    %v358 = vunpack.c.l.b16 %v335
    %v359 = vunpack.c.l.b16 %v336
    %v360 = vpack.c.b16 %v353, %v352
    %v361 = vpack.c.b16 %v355, %v354
    %v362 = vpack.c.b16 %v357, %v356
    %v363 = vpack.c.b16 %v359, %v358
    %vm368 = vcmask 523264
    %v370 = vsel %vm368, %v328, 0
    %372 = vmatprep.subr.bf16.mxu0 0
    %373 = vmatpush1.bf16.msra.mxu0 %v360
    %374 = vmatprep.subr.bf16.mxu0 0
    %375 = vmatpush1.bf16.msra.mxu0 %v361
    %376 = vmatprep.subr.bf16.mxu0 0
    %377 = vmatpush1.bf16.msra.mxu0 %v362
    %378 = vmatprep.subr.bf16.mxu0 0
    %379 = vmatpush1.bf16.msra.mxu0 %v363
    %380 = vmatprep.subr.bf16.mxu0 0
    %381 = vmatpush1.bf16.msra.mxu0 0
    %382 = vmatprep.subr.bf16.mxu0 0
    %383 = vmatpush1.bf16.msra.mxu0 0
    %384 = vmatprep.subr.bf16.mxu0 0
    %385 = vmatpush1.bf16.msra.mxu0 0
    %386 = vmatprep.subr.bf16.mxu0 0
    %387 = vmatpush1.bf16.msra.mxu0 0
    %388 = vmatprep.subr.bf16.mxu0 0
    %389 = vmatpush1.bf16.msra.mxu0 0
    %390 = vmatprep.subr.bf16.mxu0 0
    %391 = vmatpush1.bf16.msra.mxu0 0
    %392 = vmatprep.subr.bf16.mxu0 0
    %393 = vmatpush1.bf16.msra.mxu0 0
    %394 = vmatprep.subr.bf16.mxu0 0
    %395 = vmatpush1.bf16.msra.mxu0 0
    %396 = vmatprep.subr.bf16.mxu0 0
    %397 = vmatpush1.bf16.msra.mxu0 0
    %398 = vmatprep.subr.bf16.mxu0 0
    %399 = vmatpush1.bf16.msra.mxu0 0
    %400 = vmatprep.subr.bf16.mxu0 0
    %401 = vmatpush1.bf16.msra.mxu0 0
    %402 = vmatprep.subr.bf16.mxu0 0
    %403 = vmatpush1.bf16.msra.mxu0 0
    %404 = vmatprep.mubr.bf16.mxu0 0
    %405 = vmatmul.mubr.bf16.gmra.mrb[0].mxu0 %v370
    %v406 = vpop.f32.mrb[0].mxu0
    %v407 = vadd.f32 %v342, %v406
    %v408 = vpop.f32.mrb[0].mxu0
    %v409 = vpop.f32.mrb[0].mxu0
    %v410 = vpop.f32.mrb[0].mxu0
    %411 = vdwg.mxu0
    %vm412 = vcmask 130048
    %413 = vst.msk [vmem:[#allocation2] sm:$0xff] %vm412, %v407
    // Predicated region
    $region38: #{tpu_custom_call.1} parent=1 // pred_check
      _
    $region39: #{tpu_custom_call.1} parent=1 // pred_check_branch
      %415 = sbr.rel (0) target = $region41
    $region40: #{tpu_custom_call.1} parent=1 // pred_region
      %s417 = ssub.s32 128, 128
      %418 = vsyncadd [#allocation3], %s417
      %s420 = sshll.u32 [#allocation2], 4
      %s421 = int_to_ptr.vmem [resolvable:$true] %s420
      %423 = dma.vmem_to_hbm [thread:$0]  %s421, 128, %s9, [#allocation3]
    $region41: #{tpu_custom_call.1} parent=1 // pred_fallthru
      _
    // Predicated region
    $region42: #{tpu_custom_call.1} parent=1 // pred_check
      _
    $region43: #{tpu_custom_call.1} parent=1 // pred_check_branch
      %425 = sbr.rel (0) target = $region45
    $region44: #{tpu_custom_call.1} parent=1 // pred_region
      %426 = dma.done [#allocation3], 128
    $region45: #{tpu_custom_call.1} parent=1 // pred_fallthru
      _
    %427 = vsyncpa [#allocation3], 1

</llo_original>
